<compile_context>
chip_gen: v7x
topology: tpu7x:2x2x1
jax: 0.10.0
libtpu: 0.0.40
codegen_flags: <defaults>
</compile_context>

<pallas_src>
import jax
import jax.numpy as jnp
from jax.experimental import pallas as pl
from jax.experimental.pallas import tpu as pltpu

_LANES = 128
# Below this, the Pallas custom call (launch + forced HBM round trip) loses to
# letting XLA fuse the exp into its producer — typical chrombpnet count-head
# tensors are tiny and take this path.
_DEFAULT_SMALL_FALLBACK_BYTES = 256 * 1024


def _exp_kernel(x_ref, o_ref):
    # Elementwise hot path: load tile -> EUP exp -> store tile.
    o_ref[...] = jnp.exp(x_ref[...])


def _chip_tuning():
    """Return (block_bytes, split_for_two_cores) for the local TPU generation."""
    kind = ""
    try:
        kind = jax.devices()[0].device_kind.lower()
    except Exception:
        pass
    if "v7" in kind:
        # ~3.2 TB/s per-TC HBM: bigger blocks amortize per-step overhead;
        # 2 TensorCores/chip want a grid of >= 2 parallel steps.
        return 6 * 1024 * 1024, True
    if "v6" in kind:
        # ~1.4 TB/s: 4 MiB halves the fixed per-step cost vs 2 MiB.
        return 4 * 1024 * 1024, False
    if "v5" in kind or "v4" in kind:
        # ~0.8 TB/s: 2 MiB is already ~93% of roofline; stay conservative.
        return 2 * 1024 * 1024, False
    return 4 * 1024 * 1024, False


def _exp_2d(x2d: jax.Array) -> jax.Array:
    """Run the exp kernel over a (rows, 128) lane-dense slab."""
    rows, lanes = x2d.shape
    itemsize = jnp.dtype(x2d.dtype).itemsize
    block_bytes, want_two_steps = _chip_tuning()

    # Dtype-aware packed sublane multiple: f32 -> 8, bf16/f16 -> 16, int8/fp8 -> 32.
    sub = 8 * max(1, 4 // itemsize)

    # Row tile chosen by byte budget, rounded down to the packed sublane
    # multiple, and never taller than the (sublane-rounded) array.
    row_tile = max(sub, block_bytes // (lanes * itemsize))
    row_tile = (row_tile // sub) * sub
    rows_rounded = ((rows + sub - 1) // sub) * sub
    row_tile = min(row_tile, rows_rounded)

    # v7x: a grid of 1 on a ("parallel",) axis leaves one TensorCore idle, so
    # split a single-block tensor into (at least) two steps when possible.
    if want_two_steps and row_tile >= rows_rounded and rows_rounded >= 2 * sub:
        half = (rows + 1) // 2
        row_tile = ((half + sub - 1) // sub) * sub

    # cdiv grid: no divisibility requirement; Pallas masks the partial last
    # block, so awkward row counts never force tiny tiles or VMEM-busting ones.
    grid = (pl.cdiv(rows, row_tile),)

    # Explicit scoped-VMEM budget: double-buffered input + output blocks plus
    # generous headroom for internal scratch (max ~40 MiB on v7x, well inside
    # every generation's physical VMEM).
    vmem_limit = int(4 * row_tile * lanes * itemsize + (16 << 20))

    return pl.pallas_call(
        _exp_kernel,
        out_shape=jax.ShapeDtypeStruct((rows, lanes), x2d.dtype),
        grid_spec=pl.GridSpec(
            grid=grid,
            in_specs=[pl.BlockSpec((row_tile, lanes), lambda i: (i, 0))],
            out_specs=pl.BlockSpec((row_tile, lanes), lambda i: (i, 0)),
        ),
        compiler_params=pltpu.CompilerParams(
            # Shards the grid across both v7x TensorCores; harmless elsewhere.
            dimension_semantics=("parallel",),
            vmem_limit_bytes=vmem_limit,
        ),
    )(x2d)


def exp_pallas(x: jax.Array,
               *,
               small_fallback_bytes: int = _DEFAULT_SMALL_FALLBACK_BYTES) -> jax.Array:
    """Elementwise exp. Pallas kernel for large, 128-aligned tensors; fused
    XLA exp otherwise (small tensors, or sizes with no zero-copy lane-dense
    2D view — routing those through slice/pad/concat would only add extra
    full HBM passes)."""
    n = x.size
    if n == 0:
        return jnp.exp(x)

    nbytes = n * jnp.dtype(x.dtype).itemsize
    if nbytes < small_fallback_bytes or n % _LANES != 0:
        return jnp.exp(x)

    rows = n // _LANES
    y2d = _exp_2d(x.reshape(rows, _LANES))
    return y2d.reshape(x.shape)


if __name__ == "__main__":
    key = jax.random.PRNGKey(0)

    # Small NCHW-style input consistent with how the module would be used.
    x = jax.random.normal(key, (2, 4, 16, 16), dtype=jnp.float32)
    ref = jnp.exp(x)

    # Force the Pallas path even at this small size so the kernel itself runs
    # (the default heuristic routes tiny tensors to fused jnp.exp).
    y = jax.block_until_ready(exp_pallas(x, small_fallback_bytes=0))
    assert y.shape == x.shape and y.dtype == x.dtype
    assert jnp.allclose(y, ref, rtol=1e-6, atol=1e-6)

    # Default heuristic path (small tensor -> fused XLA exp) stays correct.
    y_default = jax.block_until_ready(exp_pallas(x))
    assert jnp.allclose(y_default, ref, rtol=1e-6, atol=1e-6)

    # Non-multiple-of-128 numel: routed to plain exp (no slice+concat repair).
    x2 = jax.random.normal(jax.random.PRNGKey(1), (5, 7, 13), dtype=jnp.float32)
    y2 = jax.block_until_ready(exp_pallas(x2, small_fallback_bytes=0))
    assert y2.shape == x2.shape and y2.dtype == x2.dtype
    assert jnp.allclose(y2, jnp.exp(x2), rtol=1e-6, atol=1e-6)

    # bf16 path exercises the dtype-aware (16, 128) packed tile.
    x3 = jax.random.normal(jax.random.PRNGKey(2), (4, 8, 128), dtype=jnp.bfloat16)
    y3 = jax.block_until_ready(exp_pallas(x3, small_fallback_bytes=0))
    assert y3.shape == x3.shape and y3.dtype == jnp.bfloat16
    assert jnp.allclose(y3.astype(jnp.float32),
                        jnp.exp(x3.astype(jnp.float32)),
                        rtol=5e-2, atol=5e-2)

    print("KERNEL_OK")
</pallas_src>

<mosaic_0001>
module attributes {stable_mosaic.version = 11 : i64} {
  func.func @_exp_kernel(%arg0: i32, %arg1: memref<16x128xf32, #tpu.memory_space<vmem>>, %arg2: memref<16x128xf32, #tpu.memory_space<vmem>>) attributes {dimension_semantics = [#tpu.dimension_semantics<parallel>], iteration_bounds = array<i64: 1>, scalar_prefetch = 0 : i64, scratch_operands = 0 : i64, tpu.core_type = #tpu.core_type<tc>, window_params = [{transform_indices = @transform_0, window_bounds = array<i64: 16, 128>}, {transform_indices = @transform_1, window_bounds = array<i64: 16, 128>}]} {
    %c0 = arith.constant 0 : index
    %c0_0 = arith.constant 0 : index
    %0 = vector.load %arg1[%c0, %c0_0] : memref<16x128xf32, #tpu.memory_space<vmem>>, vector<16x128xf32>
    %1 = math.exp %0 : vector<16x128xf32>
    %c0_1 = arith.constant 0 : index
    %c0_2 = arith.constant 0 : index
    %2 = vector.load %arg2[%c0_1, %c0_2] : memref<16x128xf32, #tpu.memory_space<vmem>>, vector<16x128xf32>
    tpu.vector_store %arg2[%c0_1, %c0_2], %1 {strides = array<i32>} : memref<16x128xf32, #tpu.memory_space<vmem>>, vector<16x128xf32>,
    return
  }
  func.func @transform_0(%arg0: i32) -> (i32, i32) {
    %c0_i32 = arith.constant 0 : i32
    %c0_i32_0 = arith.constant 0 : i32
    return %arg0, %c0_i32 : i32, i32
  }
  func.func @transform_1(%arg0: i32) -> (i32, i32) {
    %c0_i32 = arith.constant 0 : i32
    %c0_i32_0 = arith.constant 0 : i32
    return %arg0, %c0_i32 : i32, i32
  }
}

</mosaic_0001>

<llo_original>
// kernel: tpu_custom_call.1
$region0: #{tpu_custom_call.1}
  #allocation0 [shape = 'u32[]', space=smem, size = 0x4, offset = 0x4, fixed_abs, tag = 'smem constant byte address 0x4 - core index']
  #allocation1 [shape = 'u32[144,128]{1,0:T(1,128)}', space=vmem, size = 0x12000, scoped, tag = 'internal scratch']
  %s0 = inlined_call_operand.hbm [shape: f32[16,128], index: 0, kind: input, shape index: {}]
  %s1 = inlined_call_operand.hbm [shape: f32[16,128], index: 1, kind: output, shape index: {}]
  %s2 = sld [smem:[#allocation0]]
  $region18: #{tpu_custom_call.1} parent=0
    _
  %s4 = ssub.s32 1, %s2
  %s5 = scalar_select 0, %s4, %s2
  $region1: #{tpu_custom_call.1} parent=0
    #allocation2 [shape = 'u8[8192]{0}', space=vmem, size = 0x2000, scoped, tag = 'input window, operand 0, single buffered']
    #allocation3 [shape = 's32[1]{0}', space=sflag, size = 0x4, scoped, tag = 'scoped memory for tpu_custom_call.1']
    #allocation4 [shape = 's32[1]{0}', space=sflag, size = 0x4, scoped, tag = 'scoped memory for tpu_custom_call.1']
    #allocation5 [shape = 'u8[8192]{0}', space=vmem, size = 0x2000, scoped, tag = 'output window, operand 0, single buffered']
    %6 = vsyncpa [#allocation3], 0
    %7 = vsyncpa [#allocation4], 0
    // Predicated region
    $region2: #{tpu_custom_call.1} parent=1 // pred_check
      _
    $region3: #{tpu_custom_call.1} parent=1 // pred_check_branch
      %9 = sbr.rel (0) target = $region5
    $region4: #{tpu_custom_call.1} parent=1 // pred_region
      %s11 = ssub.s32 256, 256
      %12 = vsyncadd [#allocation3], %s11
      %s13 = sshll.u32 [#allocation2], 4
      %s14 = int_to_ptr.vmem [resolvable:$true] %s13
      %19 = dma.hbm_to_vmem [thread:$0]  %s0, 256, %s14, [#allocation3], 128, 128, 8
    $region5: #{tpu_custom_call.1} parent=1 // pred_fallthru
      _
    // Predicated region
    $region6: #{tpu_custom_call.1} parent=1 // pred_check
      _
    $region7: #{tpu_custom_call.1} parent=1 // pred_check_branch
      %21 = sbr.rel (0) target = $region9
    $region8: #{tpu_custom_call.1} parent=1 // pred_region
      %22 = dma.done [#allocation3], 256
    $region9: #{tpu_custom_call.1} parent=1 // pred_fallthru
      _
    %v23 = vld [vmem:[#allocation2] sm:$0xff]
    %v24 = vld [vmem:[#allocation2 + $0x8] sm:$0xff]
    %v25 = vmul.f32 %v23, 1.442695
    %v26 = vpow.pop %v25
    %v27 = vmul.f32 %v24, 1.442695
    %v28 = vpow.pop %v27
    %29 = vst [vmem:[#allocation5] sm:$0xff] %v26
    %30 = vst [vmem:[#allocation5 + $0x8] sm:$0xff] %v28
    // Predicated region
    $region10: #{tpu_custom_call.1} parent=1 // pred_check
      _
    $region11: #{tpu_custom_call.1} parent=1 // pred_check_branch
      %32 = sbr.rel (0) target = $region13
    $region12: #{tpu_custom_call.1} parent=1 // pred_region
      %s34 = ssub.s32 256, 256
      %35 = vsyncadd [#allocation4], %s34
      %s36 = sshll.u32 [#allocation5], 4
      %s37 = int_to_ptr.vmem [resolvable:$true] %s36
      %42 = dma.vmem_to_hbm [thread:$0]  %s37, 256, %s1, [#allocation4], 128, 128, 8
    $region13: #{tpu_custom_call.1} parent=1 // pred_fallthru
      _
    // Predicated region
    $region14: #{tpu_custom_call.1} parent=1 // pred_check
      _
    $region15: #{tpu_custom_call.1} parent=1 // pred_check_branch
      %44 = sbr.rel (0) target = $region17
    $region16: #{tpu_custom_call.1} parent=1 // pred_region
      %45 = dma.done [#allocation4], 256
    $region17: #{tpu_custom_call.1} parent=1 // pred_fallthru
      _
    %46 = vsyncpa [#allocation3], 1
    %47 = vsyncpa [#allocation4], 1

</llo_original>
